<compile_context>
chip_gen: v7x
topology: tpu7x:2x2x1
jax: 0.10.0
libtpu: 0.0.40
codegen_flags: <defaults>
</compile_context>

<pallas_src>
import jax
import jax.numpy as jnp
from jax.experimental import pallas as pl
from jax.experimental.pallas import tpu as pltpu

# ~8 MiB per block: 2 operands x 2 double-buffers x 8 MiB = 32 MiB of VMEM,
# which fits every generation once the scoped limit is raised below.
_TARGET_BLOCK_BYTES = 8 * 1024 * 1024
_VMEM_LIMIT_BYTES = 40 * 1024 * 1024
# Above this size, force the grid to have >= 2 blocks (cross-TC sharding on v7x).
_MIN_SPLIT_BYTES = 1 * 1024 * 1024


def _copy_kernel(x_ref, o_ref):
    # Pure copy of the current (tile_r, tile_c) VMEM tile.
    o_ref[...] = x_ref[...]


def _sublane(itemsize: int) -> int:
    # Packed sublane count: 8 for 4-byte, 16 for 2-byte, 32 for 1-byte dtypes.
    return max(8, 32 // max(1, itemsize))


def _lane_dense_presentation(total: int):
    """Present the flat element stream as (rows, lanes), lanes a multiple of 128."""
    if total % 128 != 0:
        return None
    for lanes in (4096, 2048, 1024, 512, 256, 128):
        if total % lanes == 0:
            return total // lanes, lanes
    return None


def _choose_tiles(rows: int, cols: int, itemsize: int,
                  target_bytes: int = _TARGET_BLOCK_BYTES):
    """Byte-capped 2-D tiling: (tile_r multiple of sublane, tile_c multiple of 128)."""
    sub = _sublane(itemsize)
    row_bytes = cols * itemsize
    if rows * row_bytes <= target_bytes:
        tr, tc = rows, cols                               # whole array in one block
    elif row_bytes <= target_bytes:
        tr = max(sub, (target_bytes // row_bytes) // sub * sub)
        tr, tc = min(tr, rows), cols                      # full-width rows
    else:
        tc = max(128, min(cols, (target_bytes // (sub * itemsize)) // 128 * 128))
        tr = min(sub, rows)                               # tile both axes
    # v7x has 2 TensorCores: make sizeable copies produce >= 2 grid blocks so the
    # "parallel" axis can actually shard across both cores.
    if (pl.cdiv(rows, tr) * pl.cdiv(cols, tc) == 1
            and rows >= 2 * sub
            and rows * row_bytes >= _MIN_SPLIT_BYTES):
        half = (rows + 1) // 2
        tr = (half + sub - 1) // sub * sub
    return tr, tc


def _materialized_copy_2d(x2d: jax.Array) -> jax.Array:
    """Tiled HBM->VMEM->HBM copy of a 2-D array (used only when materialize=True)."""
    rows, cols = x2d.shape
    itemsize = jnp.dtype(x2d.dtype).itemsize
    tr, tc = _choose_tiles(rows, cols, itemsize)
    grid = (pl.cdiv(rows, tr), pl.cdiv(cols, tc))
    return pl.pallas_call(
        _copy_kernel,
        out_shape=jax.ShapeDtypeStruct((rows, cols), x2d.dtype),
        grid_spec=pltpu.PrefetchScalarGridSpec(
            num_scalar_prefetch=0,
            grid=grid,
            in_specs=[pl.BlockSpec((tr, tc), lambda i, j: (i, j))],
            out_specs=pl.BlockSpec((tr, tc), lambda i, j: (i, j)),
        ),
        compiler_params=pltpu.CompilerParams(
            dimension_semantics=("parallel", "parallel"),
            vmem_limit_bytes=_VMEM_LIMIT_BYTES,
        ),
    )(x2d)


def flatten(x: jax.Array, dim: int = -1, materialize: bool = False) -> jax.Array:
    """Flatten.forward: x -> x.view(x.size(0), -1).

    Default path is a metadata-only reshape (no kernel, no HBM traffic) for
    contiguous inputs.  Set materialize=True to force a Pallas tiled copy into
    a fresh (N, F) buffer.
    """
    n = x.shape[0]
    f = 1
    for d in x.shape[1:]:
        f *= d
    # PyTorch view(N, dim): dim == -1 means "infer"; otherwise it must equal F.
    if dim != -1 and dim != f:
        raise ValueError(f"view(N, {dim}) incompatible with trailing size {f}")

    # Metadata-only collapse of trailing dims (free for contiguous layouts).
    x2 = x.reshape(n, f)
    if not materialize:
        return x2

    total = n * f
    pres = _lane_dense_presentation(total)
    if pres is not None:
        rows, cols = pres
        out2d = _materialized_copy_2d(x2.reshape(rows, cols))
        return out2d.reshape(n, f)
    # N*F not a multiple of 128: copy the (N, F) presentation directly; Pallas
    # partial-block handling keeps it correct (masked stores on the lane tail).
    return _materialized_copy_2d(x2)


if __name__ == "__main__":
    key = jax.random.PRNGKey(0)
    shape = (2, 4, 16, 16)  # NCHW, as the module's forward implies
    x = jax.random.normal(key, shape, dtype=jnp.float32)
    ref = x.reshape(shape[0], -1)

    out_view = flatten(x)                    # default: free reshape, no kernel
    out_copy = flatten(x, materialize=True)  # Pallas tiled-copy kernel
    jax.block_until_ready(out_copy)

    assert out_view.shape == (2, 4 * 16 * 16)
    assert out_copy.shape == (2, 4 * 16 * 16)
    assert jnp.array_equal(out_view, ref)
    assert jnp.array_equal(out_copy, ref)

    # Non-128-multiple feature count exercises the (N, F) fallback presentation.
    x_odd = jax.random.normal(jax.random.PRNGKey(0), (2, 3, 5, 7), dtype=jnp.float32)
    out_odd = flatten(x_odd, materialize=True)
    jax.block_until_ready(out_odd)
    assert jnp.array_equal(out_odd, x_odd.reshape(2, -1))

    print("KERNEL_OK")
</pallas_src>

<mosaic_0001>
module attributes {stable_mosaic.version = 11 : i64} {
  func.func @_copy_kernel(%arg0: i32, %arg1: i32, %arg2: memref<1x2048xf32, #tpu.memory_space<vmem>>, %arg3: memref<1x2048xf32, #tpu.memory_space<vmem>>) attributes {dimension_semantics = [#tpu.dimension_semantics<parallel>, #tpu.dimension_semantics<parallel>], iteration_bounds = array<i64: 1, 1>, scalar_prefetch = 0 : i64, scratch_operands = 0 : i64, tpu.core_type = #tpu.core_type<tc>, window_params = [{transform_indices = @transform_0, window_bounds = array<i64: 1, 2048>}, {transform_indices = @transform_1, window_bounds = array<i64: 1, 2048>}]} {
    %c0 = arith.constant 0 : index
    %c0_0 = arith.constant 0 : index
    %0 = vector.load %arg2[%c0, %c0_0] : memref<1x2048xf32, #tpu.memory_space<vmem>>, vector<1x2048xf32>
    %c0_1 = arith.constant 0 : index
    %c0_2 = arith.constant 0 : index
    %1 = vector.load %arg3[%c0_1, %c0_2] : memref<1x2048xf32, #tpu.memory_space<vmem>>, vector<1x2048xf32>
    tpu.vector_store %arg3[%c0_1, %c0_2], %0 {strides = array<i32>} : memref<1x2048xf32, #tpu.memory_space<vmem>>, vector<1x2048xf32>,
    return
  }
  func.func @transform_0(%arg0: i32, %arg1: i32) -> (i32, i32) {
    %c0_i32 = arith.constant 0 : i32
    return %arg0, %arg1 : i32, i32
  }
  func.func @transform_1(%arg0: i32, %arg1: i32) -> (i32, i32) {
    %c0_i32 = arith.constant 0 : i32
    return %arg0, %arg1 : i32, i32
  }
}

</mosaic_0001>

<llo_original>
// kernel: tpu_custom_call.1
$region0: #{tpu_custom_call.1}
  #allocation0 [shape = 'u32[]', space=smem, size = 0x4, offset = 0x4, fixed_abs, tag = 'smem constant byte address 0x4 - core index']
  #allocation1 [shape = 'u32[144,128]{1,0:T(1,128)}', space=vmem, size = 0x12000, scoped, tag = 'internal scratch']
  %s0 = inlined_call_operand.hbm [shape: f32[1,2048], index: 0, kind: input, shape index: {}]
  %s1 = inlined_call_operand.hbm [shape: f32[1,2048], index: 1, kind: output, shape index: {}]
  %s2 = sld [smem:[#allocation0]]
  $region18: #{tpu_custom_call.1} parent=0
    _
  %s4 = ssub.s32 1, %s2
  %s5 = scalar_select 0, %s4, %s2
  $region1: #{tpu_custom_call.1} parent=0
    #allocation2 [shape = 'u8[8192]{0}', space=vmem, size = 0x2000, scoped, tag = 'input window, operand 0, single buffered']
    #allocation3 [shape = 's32[1]{0}', space=sflag, size = 0x4, scoped, tag = 'scoped memory for tpu_custom_call.1']
    #allocation4 [shape = 's32[1]{0}', space=sflag, size = 0x4, scoped, tag = 'scoped memory for tpu_custom_call.1']
    #allocation5 [shape = 'u8[8192]{0}', space=vmem, size = 0x2000, scoped, tag = 'output window, operand 0, single buffered']
    %6 = vsyncpa [#allocation3], 0
    %7 = vsyncpa [#allocation4], 0
    // Predicated region
    $region2: #{tpu_custom_call.1} parent=1 // pred_check
      _
    $region3: #{tpu_custom_call.1} parent=1 // pred_check_branch
      %9 = sbr.rel (0) target = $region5
    $region4: #{tpu_custom_call.1} parent=1 // pred_region
      %s11 = ssub.s32 256, 256
      %12 = vsyncadd [#allocation3], %s11
      %s14 = sshll.u32 [#allocation2], 4
      %s15 = int_to_ptr.vmem [resolvable:$true] %s14
      %17 = dma.hbm_to_vmem [thread:$0]  %s0, 256, %s15, [#allocation3]
    $region5: #{tpu_custom_call.1} parent=1 // pred_fallthru
      _
    // Predicated region
    $region6: #{tpu_custom_call.1} parent=1 // pred_check
      _
    $region7: #{tpu_custom_call.1} parent=1 // pred_check_branch
      %19 = sbr.rel (0) target = $region9
    $region8: #{tpu_custom_call.1} parent=1 // pred_region
      %20 = dma.done [#allocation3], 256
    $region9: #{tpu_custom_call.1} parent=1 // pred_fallthru
      _
    %v21 = vld [vmem:[#allocation2] sm:$0xff]
    %v22 = vld [vmem:[#allocation2 + $0x8] sm:$0xff]
    %23 = vst [vmem:[#allocation5] sm:$0xff] %v21
    %24 = vst [vmem:[#allocation5 + $0x8] sm:$0xff] %v22
    // Predicated region
    $region10: #{tpu_custom_call.1} parent=1 // pred_check
      _
    $region11: #{tpu_custom_call.1} parent=1 // pred_check_branch
      %26 = sbr.rel (0) target = $region13
    $region12: #{tpu_custom_call.1} parent=1 // pred_region
      %s28 = ssub.s32 256, 256
      %29 = vsyncadd [#allocation4], %s28
      %s31 = sshll.u32 [#allocation5], 4
      %s32 = int_to_ptr.vmem [resolvable:$true] %s31
      %34 = dma.vmem_to_hbm [thread:$0]  %s32, 256, %s1, [#allocation4]
    $region13: #{tpu_custom_call.1} parent=1 // pred_fallthru
      _
    // Predicated region
    $region14: #{tpu_custom_call.1} parent=1 // pred_check
      _
    $region15: #{tpu_custom_call.1} parent=1 // pred_check_branch
      %36 = sbr.rel (0) target = $region17
    $region16: #{tpu_custom_call.1} parent=1 // pred_region
      %37 = dma.done [#allocation4], 256
    $region17: #{tpu_custom_call.1} parent=1 // pred_fallthru
      _
    %38 = vsyncpa [#allocation3], 1
    %39 = vsyncpa [#allocation4], 1

</llo_original>
